<compile_context>
chip_gen: v7x
topology: tpu7x:2x2x1
jax: 0.10.0
libtpu: 0.0.40
codegen_flags: <defaults>
</compile_context>

<pallas_src>
import functools

import jax
import jax.numpy as jnp
from jax import lax
from jax.experimental import pallas as pl
from jax.experimental.pallas import tpu as pltpu


def _conv3x3_rowmm_kernel(x_ref, w_ref, b_ref, out_ref, acc_ref, *, H):
    # x_ref:   (NB, H, W*Cin)       bf16, channels-last flattened on lanes
    # w_ref:   (3, W*Cin, W*Cout)   bf16 per-kh banded weights (kw taps + W padding folded in)
    # b_ref:   (1, W*Cout)          f32 bias tiled lane-dense over W
    # out_ref: (NB, H, W*Cout)      lane-dense output slab
    # acc_ref: VMEM (NB, H, W*Cout) f32 accumulator scratch
    NB = x_ref.shape[0]

    # Bias folded into the f32 accumulator init (lane-dense over W).
    # Written unconditionally every grid step (axis is 'parallel': each
    # megacore core owns its own scratch -- never gate on program_id == 0).
    acc_ref[...] = jnp.broadcast_to(b_ref[...], acc_ref.shape)

    # Per-image shifted-row MXU matmuls: bf16 operands, f32 accumulation.
    # H padding is realised by restricting which output rows each kh tap
    # contributes to (no padded scratch, no halo copy, no relayout).
    # TODO(synk): at production sizes fuse the 3 kh taps into one K=3*W*Cin
    # matmul (single MXU weight push / result drain).
    for b in range(NB):
        # centre tap kh=1: every output row reads its own input row
        acc_ref[b] += jnp.dot(x_ref[b], w_ref[1],
                              preferred_element_type=jnp.float32)
        if H > 1:
            # kh=0: output row h reads input row h-1  (valid for h >= 1)
            acc_ref[b, 1:H, :] += jnp.dot(x_ref[b, 0:H - 1, :], w_ref[0],
                                          preferred_element_type=jnp.float32)
            # kh=2: output row h reads input row h+1  (valid for h <= H-2)
            acc_ref[b, 0:H - 1, :] += jnp.dot(x_ref[b, 1:H, :], w_ref[2],
                                              preferred_element_type=jnp.float32)

    out_ref[...] = acc_ref[...].astype(out_ref.dtype)


def prepare_projection_params(weight_oihw, bias, W):
    """Precompute (once, next to the params) the banded conv weights.

    Returns:
      wk:      (3, W*Cin, W*Cout) bf16, with
               wk[kh, w_in*Cin + ci, w_out*Cout + co] = weight[co, ci, kh, kw]
               where w_in = w_out + kw - 1, zero when w_in is outside [0, W)
               (that IS the padding=1 behaviour along W).
      b_dense: (1, W*Cout) f32 bias tiled lane-dense over W.
    """
    Cout, Cin, KH, KW = weight_oihw.shape
    w_hwio = jnp.transpose(weight_oihw, (2, 3, 1, 0))          # (3, 3, Cin, Cout)

    w_out = jnp.arange(W)
    w_in = w_out[None, :] + jnp.arange(KW)[:, None] - (KW // 2)  # (KW, W_out)
    sel = ((w_in[:, None, :] == jnp.arange(W)[None, :, None])
           & (w_in[:, None, :] >= 0) & (w_in[:, None, :] < W))   # (KW, W_in, W_out)
    sel = sel.astype(jnp.float32)

    # Single one-hot einsum instead of 9 masked scatter-add passes.
    wk = jnp.einsum('kio,hkcd->hicod', sel, w_hwio.astype(jnp.float32))
    wk = wk.reshape(KH, W * Cin, W * Cout).astype(jnp.bfloat16)

    b_dense = jnp.tile(bias, W).reshape(1, W * Cout).astype(jnp.float32)
    return wk, b_dense


def _pick_block_batch(N, H, *, max_rows=2048, min_steps=2):
    """Largest divisor NB of N with NB*H <= max_rows and at least `min_steps`
    grid steps (so the 'parallel' axis can shard across v7x's two TCs)."""
    target_steps = min_steps if N >= min_steps else 1
    nb = 1
    for cand in range(1, N + 1):
        if N % cand == 0 and cand * H <= max_rows and N // cand >= target_steps:
            nb = cand
    return nb


def projection_forward_nhwc(x_nhwc, wk, b_dense):
    """Conv2d(k=3, stride=1, padding=1) on NHWC activations."""
    N, H, W, Cin = x_nhwc.shape
    WCin = W * Cin
    WCout = b_dense.shape[-1]
    Cout = WCout // W

    # Free metadata reshape in NHWC; bf16 operands for the MXU.
    x_rows = x_nhwc.reshape(N, H, WCin).astype(jnp.bfloat16)

    NB = _pick_block_batch(N, H)
    grid = (N // NB,)

    kernel = functools.partial(_conv3x3_rowmm_kernel, H=H)

    out_rows = pl.pallas_call(
        kernel,
        out_shape=jax.ShapeDtypeStruct((N, H, WCout), x_nhwc.dtype),
        grid_spec=pltpu.PrefetchScalarGridSpec(
            num_scalar_prefetch=0,
            grid=grid,
            in_specs=[
                pl.BlockSpec((NB, H, WCin), lambda i: (i, 0, 0)),
                pl.BlockSpec((3, WCin, WCout), lambda i: (0, 0, 0)),
                pl.BlockSpec((1, WCout), lambda i: (0, 0)),
            ],
            out_specs=pl.BlockSpec((NB, H, WCout), lambda i: (i, 0, 0)),
            scratch_shapes=[pltpu.VMEM((NB, H, WCout), jnp.float32)],
        ),
        compiler_params=pltpu.CompilerParams(
            dimension_semantics=("parallel",)),
    )(x_rows, wk, b_dense)

    return out_rows.reshape(N, H, W, Cout)


def projection_forward(x_nchw, wk, b_dense):
    """Equivalent of Projection.forward (NCHW API, like the PyTorch module).

    x_nchw: (N, Cin, H, W) float32;  wk / b_dense from prepare_projection_params.
    returns (N, Cout, H, W) float32.
    """
    # TODO(synk): keep activations NHWC end-to-end in the surrounding model to
    # drop these two full-activation transposes (HBM round trips).
    x_nhwc = jnp.transpose(x_nchw, (0, 2, 3, 1))
    out_nhwc = projection_forward_nhwc(x_nhwc, wk, b_dense)
    return jnp.transpose(out_nhwc, (0, 3, 1, 2))


def _reference_conv(x_nchw, weight_oihw, bias):
    out = lax.conv_general_dilated(
        x_nchw, weight_oihw,
        window_strides=(1, 1), padding=((1, 1), (1, 1)),
        dimension_numbers=("NCHW", "OIHW", "NCHW"))
    return out + bias.reshape(1, -1, 1, 1)


if __name__ == "__main__":
    # Small deterministic setup consistent with Projection(in_chs=4, out_chs=8).
    in_chs, out_chs = 4, 8
    N, H, W = 2, 16, 16

    key = jax.random.PRNGKey(0)
    kx, kw_, kb = jax.random.split(key, 3)

    x = jax.random.normal(kx, (N, in_chs, H, W), dtype=jnp.float32)

    # PyTorch Conv2d default init: uniform(-b, b), b = 1/sqrt(fan_in).
    fan_in = in_chs * 3 * 3
    bound = 1.0 / (fan_in ** 0.5)
    weight = jax.random.uniform(kw_, (out_chs, in_chs, 3, 3),
                                minval=-bound, maxval=bound, dtype=jnp.float32)
    bias = jax.random.uniform(kb, (out_chs,),
                              minval=-bound, maxval=bound, dtype=jnp.float32)

    # Banded weights built ONCE next to the params, not per forward call.
    wk, b_dense = prepare_projection_params(weight, bias, W)
    wk = jax.block_until_ready(wk)

    fwd = jax.jit(projection_forward)
    out = jax.block_until_ready(fwd(x, wk, b_dense))

    ref = jax.block_until_ready(_reference_conv(x, weight, bias))
    assert out.shape == (N, out_chs, H, W)
    # bf16 matmul operands -> looser tolerance than the pure-f32 version.
    assert jnp.allclose(out, ref, atol=3e-2, rtol=3e-2), "mismatch vs reference conv"

    print("KERNEL_OK")
</pallas_src>

<mosaic_0001>
module attributes {stable_mosaic.version = 11 : i64} {
  func.func @_conv3x3_rowmm_kernel(%arg0: i32, %arg1: memref<1x16x64xbf16, #tpu.memory_space<vmem>>, %arg2: memref<3x64x128xbf16, #tpu.memory_space<vmem>>, %arg3: memref<1x128xf32, #tpu.memory_space<vmem>>, %arg4: memref<1x16x128xf32, #tpu.memory_space<vmem>>, %arg5: memref<1x16x128xf32, #tpu.memory_space<vmem>>) attributes {dimension_semantics = [#tpu.dimension_semantics<parallel>], iteration_bounds = array<i64: 2>, scalar_prefetch = 0 : i64, scratch_operands = 1 : i64, tpu.core_type = #tpu.core_type<tc>, window_params = [{transform_indices = @transform_0, window_bounds = array<i64: 1, 16, 64>}, {pipeline_mode = #tpu.pipeline_mode<synchronous>, transform_indices = @transform_1, window_bounds = array<i64: 3, 64, 128>}, {pipeline_mode = #tpu.pipeline_mode<synchronous>, transform_indices = @transform_2, window_bounds = array<i64: 1, 128>}, {transform_indices = @transform_3, window_bounds = array<i64: 1, 16, 128>}]} {
    %c0 = arith.constant 0 : index
    %c0_0 = arith.constant 0 : index
    %0 = vector.load %arg3[%c0, %c0_0] : memref<1x128xf32, #tpu.memory_space<vmem>>, vector<1x128xf32>
    %1 = vector.shape_cast %0 : vector<1x128xf32> to vector<1x1x128xf32>
    %2 = vector.broadcast %1 : vector<1x1x128xf32> to vector<1x16x128xf32>
    %c0_1 = arith.constant 0 : index
    %c0_2 = arith.constant 0 : index
    %c0_3 = arith.constant 0 : index
    %3 = vector.load %arg5[%c0_1, %c0_2, %c0_3] : memref<1x16x128xf32, #tpu.memory_space<vmem>>, vector<1x16x128xf32>
    tpu.vector_store %arg5[%c0_1, %c0_2, %c0_3], %2 {strides = array<i32>} : memref<1x16x128xf32, #tpu.memory_space<vmem>>, vector<1x16x128xf32>,
    %c0_4 = arith.constant 0 : index
    %c0_5 = arith.constant 0 : index
    %c0_6 = arith.constant 0 : index
    %4 = vector.load %arg5[%c0_4, %c0_5, %c0_6] : memref<1x16x128xf32, #tpu.memory_space<vmem>>, vector<1x16x128xf32>
    %5 = vector.shape_cast %4 : vector<1x16x128xf32> to vector<16x128xf32>
    %c0_7 = arith.constant 0 : index
    %c0_8 = arith.constant 0 : index
    %c0_9 = arith.constant 0 : index
    %6 = vector.load %arg1[%c0_7, %c0_8, %c0_9] : memref<1x16x64xbf16, #tpu.memory_space<vmem>>, vector<1x16x64xbf16>
    %7 = vector.shape_cast %6 : vector<1x16x64xbf16> to vector<16x64xbf16>
    %c1 = arith.constant 1 : index
    %c0_10 = arith.constant 0 : index
    %c0_11 = arith.constant 0 : index
    %8 = vector.load %arg2[%c1, %c0_10, %c0_11] : memref<3x64x128xbf16, #tpu.memory_space<vmem>>, vector<1x64x128xbf16>
    %9 = vector.shape_cast %8 : vector<1x64x128xbf16> to vector<64x128xbf16>
    %cst = arith.constant dense<0.000000e+00> : vector<16x128xf32>
    %10 = tpu.matmul %7, %9, %cst {dimension_numbers = #tpu.dot_dimension_numbers<[1], [0], [0], [1], [0, 0, 1, 1], [], []>} : vector<16x64xbf16>, vector<64x128xbf16>, vector<16x128xf32> -> vector<16x128xf32>
    %11 = arith.addf %5, %10 : vector<16x128xf32>
    %c0_12 = arith.constant 0 : index
    %c0_13 = arith.constant 0 : index
    %c0_14 = arith.constant 0 : index
    %12 = vector.load %arg5[%c0_12, %c0_13, %c0_14] : memref<1x16x128xf32, #tpu.memory_space<vmem>>, vector<1x16x128xf32>
    %13 = vector.shape_cast %12 : vector<1x16x128xf32> to vector<16x128xf32>
    %14 = vector.shape_cast %11 : vector<16x128xf32> to vector<1x16x128xf32>
    tpu.vector_store %arg5[%c0_12, %c0_13, %c0_14], %14 {strides = array<i32>} : memref<1x16x128xf32, #tpu.memory_space<vmem>>, vector<1x16x128xf32>,
    %c0_15 = arith.constant 0 : index
    %c1_16 = arith.constant 1 : index
    %c0_17 = arith.constant 0 : index
    %15 = vector.load %arg5[%c0_15, %c1_16, %c0_17] : memref<1x16x128xf32, #tpu.memory_space<vmem>>, vector<1x15x128xf32>
    %16 = vector.shape_cast %15 : vector<1x15x128xf32> to vector<15x128xf32>
    %c0_18 = arith.constant 0 : index
    %c0_19 = arith.constant 0 : index
    %c0_20 = arith.constant 0 : index
    %17 = vector.load %arg1[%c0_18, %c0_19, %c0_20] : memref<1x16x64xbf16, #tpu.memory_space<vmem>>, vector<1x15x64xbf16>
    %18 = vector.shape_cast %17 : vector<1x15x64xbf16> to vector<15x64xbf16>
    %c0_21 = arith.constant 0 : index
    %c0_22 = arith.constant 0 : index
    %c0_23 = arith.constant 0 : index
    %19 = vector.load %arg2[%c0_21, %c0_22, %c0_23] : memref<3x64x128xbf16, #tpu.memory_space<vmem>>, vector<1x64x128xbf16>
    %20 = vector.shape_cast %19 : vector<1x64x128xbf16> to vector<64x128xbf16>
    %cst_24 = arith.constant dense<0.000000e+00> : vector<15x128xf32>
    %21 = tpu.matmul %18, %20, %cst_24 {dimension_numbers = #tpu.dot_dimension_numbers<[1], [0], [0], [1], [0, 0, 1, 1], [], []>} : vector<15x64xbf16>, vector<64x128xbf16>, vector<15x128xf32> -> vector<15x128xf32>
    %22 = arith.addf %16, %21 : vector<15x128xf32>
    %c0_25 = arith.constant 0 : index
    %c1_26 = arith.constant 1 : index
    %c0_27 = arith.constant 0 : index
    %23 = vector.load %arg5[%c0_25, %c1_26, %c0_27] : memref<1x16x128xf32, #tpu.memory_space<vmem>>, vector<1x15x128xf32>
    %24 = vector.shape_cast %23 : vector<1x15x128xf32> to vector<15x128xf32>
    %25 = vector.shape_cast %22 : vector<15x128xf32> to vector<1x15x128xf32>
    tpu.vector_store %arg5[%c0_25, %c1_26, %c0_27], %25 {strides = array<i32>} : memref<1x16x128xf32, #tpu.memory_space<vmem>>, vector<1x15x128xf32>,
    %c0_28 = arith.constant 0 : index
    %c0_29 = arith.constant 0 : index
    %c0_30 = arith.constant 0 : index
    %26 = vector.load %arg5[%c0_28, %c0_29, %c0_30] : memref<1x16x128xf32, #tpu.memory_space<vmem>>, vector<1x15x128xf32>
    %27 = vector.shape_cast %26 : vector<1x15x128xf32> to vector<15x128xf32>
    %c0_31 = arith.constant 0 : index
    %c1_32 = arith.constant 1 : index
    %c0_33 = arith.constant 0 : index
    %28 = vector.load %arg1[%c0_31, %c1_32, %c0_33] : memref<1x16x64xbf16, #tpu.memory_space<vmem>>, vector<1x15x64xbf16>
    %29 = vector.shape_cast %28 : vector<1x15x64xbf16> to vector<15x64xbf16>
    %c2 = arith.constant 2 : index
    %c0_34 = arith.constant 0 : index
    %c0_35 = arith.constant 0 : index
    %30 = vector.load %arg2[%c2, %c0_34, %c0_35] : memref<3x64x128xbf16, #tpu.memory_space<vmem>>, vector<1x64x128xbf16>
    %31 = vector.shape_cast %30 : vector<1x64x128xbf16> to vector<64x128xbf16>
    %cst_36 = arith.constant dense<0.000000e+00> : vector<15x128xf32>
    %32 = tpu.matmul %29, %31, %cst_36 {dimension_numbers = #tpu.dot_dimension_numbers<[1], [0], [0], [1], [0, 0, 1, 1], [], []>} : vector<15x64xbf16>, vector<64x128xbf16>, vector<15x128xf32> -> vector<15x128xf32>
    %33 = arith.addf %27, %32 : vector<15x128xf32>
    %c0_37 = arith.constant 0 : index
    %c0_38 = arith.constant 0 : index
    %c0_39 = arith.constant 0 : index
    %34 = vector.load %arg5[%c0_37, %c0_38, %c0_39] : memref<1x16x128xf32, #tpu.memory_space<vmem>>, vector<1x15x128xf32>
    %35 = vector.shape_cast %34 : vector<1x15x128xf32> to vector<15x128xf32>
    %36 = vector.shape_cast %33 : vector<15x128xf32> to vector<1x15x128xf32>
    tpu.vector_store %arg5[%c0_37, %c0_38, %c0_39], %36 {strides = array<i32>} : memref<1x16x128xf32, #tpu.memory_space<vmem>>, vector<1x15x128xf32>,
    %c0_40 = arith.constant 0 : index
    %c0_41 = arith.constant 0 : index
    %c0_42 = arith.constant 0 : index
    %37 = vector.load %arg5[%c0_40, %c0_41, %c0_42] : memref<1x16x128xf32, #tpu.memory_space<vmem>>, vector<1x16x128xf32>
    %c0_43 = arith.constant 0 : index
    %c0_44 = arith.constant 0 : index
    %c0_45 = arith.constant 0 : index
    %38 = vector.load %arg4[%c0_43, %c0_44, %c0_45] : memref<1x16x128xf32, #tpu.memory_space<vmem>>, vector<1x16x128xf32>
    tpu.vector_store %arg4[%c0_43, %c0_44, %c0_45], %37 {strides = array<i32>} : memref<1x16x128xf32, #tpu.memory_space<vmem>>, vector<1x16x128xf32>,
    return
  }
  func.func @transform_0(%arg0: i32) -> (i32, i32, i32) {
    %c0_i32 = arith.constant 0 : i32
    %c0_i32_0 = arith.constant 0 : i32
    %c0_i32_1 = arith.constant 0 : i32
    return %arg0, %c0_i32, %c0_i32_0 : i32, i32, i32
  }
  func.func @transform_1(%arg0: i32) -> (i32, i32, i32) {
    %c0_i32 = arith.constant 0 : i32
    %c0_i32_0 = arith.constant 0 : i32
    %c0_i32_1 = arith.constant 0 : i32
    %c0_i32_2 = arith.constant 0 : i32
    return %c0_i32, %c0_i32_0, %c0_i32_1 : i32, i32, i32
  }
  func.func @transform_2(%arg0: i32) -> (i32, i32) {
    %c0_i32 = arith.constant 0 : i32
    %c0_i32_0 = arith.constant 0 : i32
    %c0_i32_1 = arith.constant 0 : i32
    return %c0_i32, %c0_i32_0 : i32, i32
  }
  func.func @transform_3(%arg0: i32) -> (i32, i32, i32) {
    %c0_i32 = arith.constant 0 : i32
    %c0_i32_0 = arith.constant 0 : i32
    %c0_i32_1 = arith.constant 0 : i32
    return %arg0, %c0_i32, %c0_i32_0 : i32, i32, i32
  }
}

</mosaic_0001>

<llo_original>
// kernel: projection_forward.1
$region0: #{projection_forward.1}
  #allocation0 [shape = 'u32[]', space=smem, size = 0x4, offset = 0x4, fixed_abs, tag = 'smem constant byte address 0x4 - core index']
  #allocation1 [shape = 'u32[144,128]{1,0:T(1,128)}', space=vmem, size = 0x12000, scoped, tag = 'internal scratch']
  #allocation2 [shape = 'f32[1,16,128]{2,1,0:T(8,128)}', space=vmem, size = 0x2000, scoped, tag = 'scratch operand']
  %s0 = inlined_call_operand.vmem [shape: bf16[2,16,64], index: 0, kind: input, shape index: {}]
  %s1 = inlined_call_operand.vmem [shape: bf16[3,64,128], index: 1, kind: input, shape index: {}]
  %s2 = inlined_call_operand.vmem [shape: f32[1,128], index: 2, kind: input, shape index: {}]
  %s3 = inlined_call_operand.vmem [shape: f32[2,16,128], index: 3, kind: output, shape index: {}]
  %s4 = sld [smem:[#allocation0]]
  $region45: #{projection_forward.1} parent=0
    _
  %s6 = ssub.s32 1, %s4
  %s7 = scalar_select 0, %s6, %s4
  loop: start=0, step=1, limit=4
  $region2: #{projection_forward.1} parent=0 // loop_pre_header
    _
  $region3: #{projection_forward.1} parent=0 // loop_header
    %s9 = sphi 0, %s13
    %p10 = scmp.ge.s32.totalorder %s9, 4
    %s19 = sphi 0, %s21
    %s22 = sphi 0, %s19
    %s23 = sphi 0, %s22
    %s39 = sphi 0, %s23
    %s43 = sphi 0, %s43
    %s45 = sphi 0, %s43
    %s46 = sphi 0, %s45
    %s60 = sphi 0, %s46
    %s64 = sphi 0, %s64
    %s66 = sphi 0, %s64
    %s67 = sphi 0, %s66
    %s81 = sphi 0, %s67
    %s87 = sphi 0, %s89
    %s90 = sphi 0, %s87
    %s91 = sphi 0, %s90
    %s107 = sphi 0, %s91
  $region4: #{projection_forward.1} parent=0 // loop_header_branch
    %12 = sbr.rel (%p10) target = $region8
  $region5: #{projection_forward.1} parent=0 // loop_body
    %s14 = ssub.s32 %s9, 1
    %s15 = ssub.s32 %s9, 2
    %s16 = sadd.s32 %s9, 1
    %s17 = ssub.s32 %s9, %s16
    %p18 = scmp.eq.s32.totalorder %s17, 0
    %s20 = sadd.s32 %s19, 1
    %s21 = scalar_select %p18, %s19, %s20
    %p24 = pneg %p18
    %p25 = scmp.eq.s32.totalorder %s9, 1
    %p26 = por %p24, %p25
    %p27 = scmp.ne.s32.totalorder %s19, %s22
    %p28 = scmp.eq.s32.totalorder %s9, 0
    %p29 = por %p27, %p28
    %p30 = scmp.ne.s32.totalorder %s19, %s22
    %p31 = scmp.eq.s32.totalorder %s14, 1
    %p32 = por %p30, %p31
    %p33 = scmp.ne.s32.totalorder %s22, %s23
    %p34 = scmp.eq.s32.totalorder %s14, 0
    %p35 = por %p33, %p34
    %p36 = scmp.ne.s32.totalorder %s22, %s23
    %p37 = scmp.eq.s32.totalorder %s15, 1
    %p38 = por %p36, %p37
    %p40 = scmp.ne.s32.totalorder %s23, %s39
    %p41 = scmp.eq.s32.totalorder %s15, 0
    %p42 = por %p40, %p41
    %s44 = sadd.s32 %s43, 1
    %p47 = scmp.eq.s32.totalorder %s9, 1
    %p48 = scmp.ne.s32.totalorder %s43, %s45
    %p49 = scmp.eq.s32.totalorder %s9, 0
    %p50 = por %p48, %p49
    %p51 = scmp.ne.s32.totalorder %s43, %s45
    %p52 = scmp.eq.s32.totalorder %s14, 1
    %p53 = por %p51, %p52
    %p54 = scmp.ne.s32.totalorder %s45, %s46
    %p55 = scmp.eq.s32.totalorder %s14, 0
    %p56 = por %p54, %p55
    %p57 = scmp.ne.s32.totalorder %s45, %s46
    %p58 = scmp.eq.s32.totalorder %s15, 1
    %p59 = por %p57, %p58
    %p61 = scmp.ne.s32.totalorder %s46, %s60
    %p62 = scmp.eq.s32.totalorder %s15, 0
    %p63 = por %p61, %p62
    %s65 = sadd.s32 %s64, 1
    %p68 = scmp.eq.s32.totalorder %s9, 1
    %p69 = scmp.ne.s32.totalorder %s64, %s66
    %p70 = scmp.eq.s32.totalorder %s9, 0
    %p71 = por %p69, %p70
    %p72 = scmp.ne.s32.totalorder %s64, %s66
    %p73 = scmp.eq.s32.totalorder %s14, 1
    %p74 = por %p72, %p73
    %p75 = scmp.ne.s32.totalorder %s66, %s67
    %p76 = scmp.eq.s32.totalorder %s14, 0
    %p77 = por %p75, %p76
    %p78 = scmp.ne.s32.totalorder %s66, %s67
    %p79 = scmp.eq.s32.totalorder %s15, 1
    %p80 = por %p78, %p79
    %p82 = scmp.ne.s32.totalorder %s67, %s81
    %p83 = scmp.eq.s32.totalorder %s15, 0
    %p84 = por %p82, %p83
    %s85 = ssub.s32 %s9, %s16
    %p86 = scmp.eq.s32.totalorder %s85, 0
    %s88 = sadd.s32 %s87, 1
    %s89 = scalar_select %p86, %s87, %s88
    %p92 = pneg %p86
    %p93 = scmp.eq.s32.totalorder %s9, 1
    %p94 = por %p92, %p93
    %p95 = scmp.ne.s32.totalorder %s87, %s90
    %p96 = scmp.eq.s32.totalorder %s9, 0
    %p97 = por %p95, %p96
    %p98 = scmp.ne.s32.totalorder %s87, %s90
    %p99 = scmp.eq.s32.totalorder %s14, 1
    %p100 = por %p98, %p99
    %p101 = scmp.ne.s32.totalorder %s90, %s91
    %p102 = scmp.eq.s32.totalorder %s14, 0
    %p103 = por %p101, %p102
    %p104 = scmp.ne.s32.totalorder %s90, %s91
    %p105 = scmp.eq.s32.totalorder %s15, 1
    %p106 = por %p104, %p105
    %p108 = scmp.ne.s32.totalorder %s91, %s107
    %p109 = scmp.eq.s32.totalorder %s15, 0
    %p110 = por %p108, %p109
    %p111 = scmp.le.s32.totalorder 1, %s9
    %p112 = scmp.lt.s32.totalorder %s9, 3
    %p113 = pnand %p111, %p112
    %p114 = pneg %p113
    // Predicated region
    $region9: #{projection_forward.1} parent=5 // pred_check
      _
    $region10: #{projection_forward.1} parent=5 // pred_check_branch
      %116 = sbr.rel (%p113) target = $region12
    $region11: #{projection_forward.1} parent=5 // pred_region
      %s117 = ssub.s32 %s9, 1
      // Predicated region
      $region13: #{projection_forward.1} parent=11 // pred_check
        %p118 = pneg %p56
      $region14: #{projection_forward.1} parent=11 // pred_check_branch
        %120 = sbr.rel (%p118) target = $region16
      $region15: #{projection_forward.1} parent=11 // pred_region
        _
      $region16: #{projection_forward.1} parent=11 // pred_fallthru
        _
      // Predicated region
      $region17: #{projection_forward.1} parent=11 // pred_check
        %p121 = pneg %p77
      $region18: #{projection_forward.1} parent=11 // pred_check_branch
        %123 = sbr.rel (%p121) target = $region20
      $region19: #{projection_forward.1} parent=11 // pred_region
        _
      $region20: #{projection_forward.1} parent=11 // pred_fallthru
        _
    $region12: #{projection_forward.1} parent=5 // pred_fallthru
      _
    %p124 = scmp.lt.s32.totalorder %s9, 2
    // Predicated region
    $region21: #{projection_forward.1} parent=5 // pred_check
      %p125 = pneg %p124
    $region22: #{projection_forward.1} parent=5 // pred_check_branch
      %127 = sbr.rel (%p125) target = $region24
    $region23: #{projection_forward.1} parent=5 // pred_region
      // Predicated region
      $region25: #{projection_forward.1} parent=23 // pred_check
        %p128 = pneg %p29
      $region26: #{projection_forward.1} parent=23 // pred_check_branch
        %130 = sbr.rel (%p128) target = $region28
      $region27: #{projection_forward.1} parent=23 // pred_region
        %p131 = scmp.lt.s32.totalorder %s9, 1
        %s132 = scalar_select %p131, %s9, 1
        %s133 = smul.addr %s132, 2
        %s134 = smul.addr %s133, 4
        %s135 = scalar_lea.vmem %s0, %s134
      $region28: #{projection_forward.1} parent=23 // pred_fallthru
        _
    $region24: #{projection_forward.1} parent=5 // pred_fallthru
      _
    %p136 = scmp.le.s32.totalorder 1, %s9
    %p137 = scmp.lt.s32.totalorder %s9, 3
    %p138 = pnand %p136, %p137
    %p139 = pneg %p138
    // Predicated region
    $region29: #{projection_forward.1} parent=5 // pred_check
      _
    $region30: #{projection_forward.1} parent=5 // pred_check_branch
      %141 = sbr.rel (%p138) target = $region32
    $region31: #{projection_forward.1} parent=5 // pred_region
      %s142 = ssub.s32 %s9, 1
      %p143 = scmp.lt.s32.totalorder %s14, 1
      %s144 = scalar_select %p143, %s14, 1
      %s145 = smul.addr %s144, 2
      %s146 = smul.addr %s145, 4
      %s147 = scalar_lea.vmem %s0, %s146
      %p148 = pneg %p35
      %p149 = pneg %p32
      %p150 = pneg %p56
      %p151 = pneg %p53
      %p152 = pneg %p77
      %p153 = pneg %p74
      %p154 = pneg %p103
      %p155 = pneg %p100
      %p156 = scmp.lt.s32.totalorder %s14, 1
      %s157 = scalar_select %p156, %s14, 1
      %s158 = smul.addr %s157, 2
      %s159 = smul.addr %s158, 8
      %s160 = scalar_lea.vmem %s3, %s159
      %p161 = scmp.lt.s32.totalorder %s14, 1
      %s162 = scalar_select %p161, %s14, 1
      %s163 = smul.addr %s162, 2
      %s164 = smul.addr %s163, 4
      %s165 = scalar_lea.vmem %s0, %s164
      %p166 = scmp.lt.s32.totalorder %s14, 1
      %s167 = scalar_select %p166, %s14, 1
      %s168 = smul.addr %s167, 2
      %s169 = smul.addr %s168, 8
      %s170 = scalar_lea.vmem %s3, %s169
      %v172 = vld [vmem:[%s2] sm:$0x1]
      %v174 = vlaneseq
      %v175 = vshrl.u32 %v174, 7
      %v176 = vsub.s32 0, %v175
      %v177 = vrot.slane %v172, %v176
      %179 = vst [vmem:[#allocation2] sm:$0xff] %v177
      %180 = vst [vmem:[#allocation2 + $0x8] sm:$0xff] %v177
      %v181 = vld [vmem:[#allocation2] sm:$0xff]
      %v182 = vld [vmem:[#allocation2 + $0x8] sm:$0xff]
      %v183 = vld [vmem:[%s165] sm:$0xf]
      %v184 = vld [vmem:[%s165 + $0x4] sm:$0xf]
      %s185 = scalar_lea.vmem %s1, 32
      %v186 = vld [vmem:[%s185] sm:$0xf]
      %v187 = vld [vmem:[%s185 + $0x4] sm:$0xf]
      %v188 = vld [vmem:[%s185 + $0x8] sm:$0xf]
      %v189 = vld [vmem:[%s185 + $0xc] sm:$0xf]
      %v190 = vld [vmem:[%s185 + $0x10] sm:$0xf]
      %v191 = vld [vmem:[%s185 + $0x14] sm:$0xf]
      %v192 = vld [vmem:[%s185 + $0x18] sm:$0xf]
      %v193 = vld [vmem:[%s185 + $0x1c] sm:$0xf]
      %v196 = vunpack.c.l.b16 %v183
      %v197 = vunpack.c.l.b16 %v184
      %v198 = vpack.c.b16 %v197, %v196
      %v207 = vunpack.c.l.b16 %v186
      %v208 = vunpack.c.l.b16 %v187
      %v209 = vunpack.c.l.b16 %v188
      %v210 = vunpack.c.l.b16 %v189
      %v211 = vunpack.c.l.b16 %v190
      %v212 = vunpack.c.l.b16 %v191
      %v213 = vunpack.c.l.b16 %v192
      %v214 = vunpack.c.l.b16 %v193
      %v215 = vpack.c.b16 %v208, %v207
      %v216 = vpack.c.b16 %v210, %v209
      %v217 = vpack.c.b16 %v212, %v211
      %v218 = vpack.c.b16 %v214, %v213
      %vm223 = vcmask 523264
      %v225 = vsel %vm223, %v198, 0
      %227 = vmatprep.subr.bf16.mxu0 0
      %228 = vmatpush1.bf16.msra.mxu0 %v215
      %229 = vmatprep.subr.bf16.mxu0 0
      %230 = vmatpush1.bf16.msra.mxu0 %v216
      %231 = vmatprep.subr.bf16.mxu0 0
      %232 = vmatpush1.bf16.msra.mxu0 %v217
      %233 = vmatprep.subr.bf16.mxu0 0
      %234 = vmatpush1.bf16.msra.mxu0 %v218
      %235 = vmatprep.subr.bf16.mxu0 0
      %236 = vmatpush1.bf16.msra.mxu0 0
      %237 = vmatprep.subr.bf16.mxu0 0
      %238 = vmatpush1.bf16.msra.mxu0 0
      %239 = vmatprep.subr.bf16.mxu0 0
      %240 = vmatpush1.bf16.msra.mxu0 0
      %241 = vmatprep.subr.bf16.mxu0 0
      %242 = vmatpush1.bf16.msra.mxu0 0
      %243 = vmatprep.subr.bf16.mxu0 0
      %244 = vmatpush1.bf16.msra.mxu0 0
      %245 = vmatprep.subr.bf16.mxu0 0
      %246 = vmatpush1.bf16.msra.mxu0 0
      %247 = vmatprep.subr.bf16.mxu0 0
      %248 = vmatpush1.bf16.msra.mxu0 0
      %249 = vmatprep.subr.bf16.mxu0 0
      %250 = vmatpush1.bf16.msra.mxu0 0
      %251 = vmatprep.subr.bf16.mxu0 0
      %252 = vmatpush1.bf16.msra.mxu0 0
      %253 = vmatprep.subr.bf16.mxu0 0
      %254 = vmatpush1.bf16.msra.mxu0 0
      %255 = vmatprep.subr.bf16.mxu0 0
      %256 = vmatpush1.bf16.msra.mxu0 0
      %257 = vmatprep.subr.bf16.mxu0 0
      %258 = vmatpush1.bf16.msra.mxu0 0
      %259 = vmatprep.mubr.bf16.mxu0 0
      %260 = vmatmul.mubr.bf16.gmra.mrb[0].mxu0 %v225
      %v261 = vpop.f32.mrb[0].mxu0
      %v262 = vadd.f32 0.0, %v261
      %v263 = vpop.f32.mrb[0].mxu0
      %v264 = vpop.f32.mrb[0].mxu0
      %v265 = vadd.f32 0.0, %v264
      %v266 = vpop.f32.mrb[0].mxu0
      %267 = vdwg.mxu0
      %v268 = vadd.f32 %v181, %v262
      %v269 = vadd.f32 %v182, %v265
      %270 = vst [vmem:[#allocation2] sm:$0xff] %v268
      %271 = vst [vmem:[#allocation2 + $0x8] sm:$0xff] %v269
      %v272 = vld [vmem:[#allocation2 + $0x1] sm:$0xff]
      %v273 = vld [vmem:[#allocation2 + $0x9] sm:$0x7f]
      %v274 = vld [vmem:[%s165] sm:$0xf]
      %v275 = vld [vmem:[%s165 + $0x4] sm:$0xf]
      %v276 = vld [vmem:[%s1] sm:$0xf]
      %v277 = vld [vmem:[%s1 + $0x4] sm:$0xf]
      %v278 = vld [vmem:[%s1 + $0x8] sm:$0xf]
      %v279 = vld [vmem:[%s1 + $0xc] sm:$0xf]
      %v280 = vld [vmem:[%s1 + $0x10] sm:$0xf]
      %v281 = vld [vmem:[%s1 + $0x14] sm:$0xf]
      %v282 = vld [vmem:[%s1 + $0x18] sm:$0xf]
      %v283 = vld [vmem:[%s1 + $0x1c] sm:$0xf]
      %v286 = vunpack.c.l.b16 %v274
      %v287 = vunpack.c.l.b16 %v275
      %v288 = vpack.c.b16 %v287, %v286
      %v297 = vunpack.c.l.b16 %v276
      %v298 = vunpack.c.l.b16 %v277
      %v299 = vunpack.c.l.b16 %v278
      %v300 = vunpack.c.l.b16 %v279
      %v301 = vunpack.c.l.b16 %v280
      %v302 = vunpack.c.l.b16 %v281
      %v303 = vunpack.c.l.b16 %v282
      %v304 = vunpack.c.l.b16 %v283
      %v305 = vpack.c.b16 %v298, %v297
      %v306 = vpack.c.b16 %v300, %v299
      %v307 = vpack.c.b16 %v302, %v301
      %v308 = vpack.c.b16 %v304, %v303
      %v314 = vsel %vm223, %v288, 0
      %316 = vmatprep.subr.bf16.mxu0 0
      %317 = vmatpush1.bf16.msra.mxu0 %v305
      %318 = vmatprep.subr.bf16.mxu0 0
      %319 = vmatpush1.bf16.msra.mxu0 %v306
      %320 = vmatprep.subr.bf16.mxu0 0
      %321 = vmatpush1.bf16.msra.mxu0 %v307
      %322 = vmatprep.subr.bf16.mxu0 0
      %323 = vmatpush1.bf16.msra.mxu0 %v308
      %324 = vmatprep.subr.bf16.mxu0 0
      %325 = vmatpush1.bf16.msra.mxu0 0
      %326 = vmatprep.subr.bf16.mxu0 0
      %327 = vmatpush1.bf16.msra.mxu0 0
      %328 = vmatprep.subr.bf16.mxu0 0
      %329 = vmatpush1.bf16.msra.mxu0 0
      %330 = vmatprep.subr.bf16.mxu0 0
      %331 = vmatpush1.bf16.msra.mxu0 0
      %332 = vmatprep.subr.bf16.mxu0 0
      %333 = vmatpush1.bf16.msra.mxu0 0
      %334 = vmatprep.subr.bf16.mxu0 0
      %335 = vmatpush1.bf16.msra.mxu0 0
      %336 = vmatprep.subr.bf16.mxu0 0
      %337 = vmatpush1.bf16.msra.mxu0 0
      %338 = vmatprep.subr.bf16.mxu0 0
      %339 = vmatpush1.bf16.msra.mxu0 0
      %340 = vmatprep.subr.bf16.mxu0 0
      %341 = vmatpush1.bf16.msra.mxu0 0
      %342 = vmatprep.subr.bf16.mxu0 0
      %343 = vmatpush1.bf16.msra.mxu0 0
      %344 = vmatprep.subr.bf16.mxu0 0
      %345 = vmatpush1.bf16.msra.mxu0 0
      %346 = vmatprep.subr.bf16.mxu0 0
      %347 = vmatpush1.bf16.msra.mxu0 0
      %348 = vmatprep.mubr.bf16.mxu0 0
      %349 = vmatmul.mubr.bf16.gmra.mrb[0].mxu0 %v314
      %v350 = vpop.f32.mrb[0].mxu0
      %v351 = vadd.f32 0.0, %v350
      %v352 = vpop.f32.mrb[0].mxu0
      %v353 = vpop.f32.mrb[0].mxu0
      %v354 = vadd.f32 0.0, %v353
      %v355 = vpop.f32.mrb[0].mxu0
      %356 = vdwg.mxu0
      %v357 = vadd.f32 %v272, %v351
      %v358 = vadd.f32 %v273, %v354
      %359 = vst [vmem:[#allocation2 + $0x1] sm:$0xff] %v357
      %360 = vst [vmem:[#allocation2 + $0x9] sm:$0x7f] %v358
      %v361 = vld [vmem:[#allocation2] sm:$0xff]
      %v362 = vld [vmem:[#allocation2 + $0x8] sm:$0x7f]
      %v363 = vld [vmem:[%s165] sm:$0xf]
      %v364 = vld [vmem:[%s165 + $0x4] sm:$0xf]
      %s365 = scalar_lea.vmem %s1, 64
      %v366 = vld [vmem:[%s365] sm:$0xf]
      %v367 = vld [vmem:[%s365 + $0x4] sm:$0xf]
      %v368 = vld [vmem:[%s365 + $0x8] sm:$0xf]
      %v369 = vld [vmem:[%s365 + $0xc] sm:$0xf]
      %v370 = vld [vmem:[%s365 + $0x10] sm:$0xf]
      %v371 = vld [vmem:[%s365 + $0x14] sm:$0xf]
      %v372 = vld [vmem:[%s365 + $0x18] sm:$0xf]
      %v373 = vld [vmem:[%s365 + $0x1c] sm:$0xf]
      %v376 = vunpack.c.l.b16 %v363
      %v377 = vunpack.c.l.b16 %v364
      %v378 = vpack.c.b16 %v377, %v376
      %v380 = vshrl.u32 %v378, 16
      %v382 = vshll.u32 %v378, 16
      %v384 = vrot.slane %v382, 1
      %v385 = vor.u32 %v380, %v384
      %v394 = vunpack.c.l.b16 %v366
      %v395 = vunpack.c.l.b16 %v367
      %v396 = vunpack.c.l.b16 %v368
      %v397 = vunpack.c.l.b16 %v369
      %v398 = vunpack.c.l.b16 %v370
      %v399 = vunpack.c.l.b16 %v371
      %v400 = vunpack.c.l.b16 %v372
      %v401 = vunpack.c.l.b16 %v373
      %v402 = vpack.c.b16 %v395, %v394
      %v403 = vpack.c.b16 %v397, %v396
      %v404 = vpack.c.b16 %v399, %v398
      %v405 = vpack.c.b16 %v401, %v400
      %v411 = vsel %vm223, %v385, 0
      %413 = vmatprep.subr.bf16.mxu0 0
      %414 = vmatpush1.bf16.msra.mxu0 %v402
      %415 = vmatprep.subr.bf16.mxu0 0
      %416 = vmatpush1.bf16.msra.mxu0 %v403
      %417 = vmatprep.subr.bf16.mxu0 0
      %418 = vmatpush1.bf16.msra.mxu0 %v404
      %419 = vmatprep.subr.bf16.mxu0 0
      %420 = vmatpush1.bf16.msra.mxu0 %v405
      %421 = vmatprep.subr.bf16.mxu0 0
      %422 = vmatpush1.bf16.msra.mxu0 0
      %423 = vmatprep.subr.bf16.mxu0 0
      %424 = vmatpush1.bf16.msra.mxu0 0
      %425 = vmatprep.subr.bf16.mxu0 0
      %426 = vmatpush1.bf16.msra.mxu0 0
      %427 = vmatprep.subr.bf16.mxu0 0
      %428 = vmatpush1.bf16.msra.mxu0 0
      %429 = vmatprep.subr.bf16.mxu0 0
      %430 = vmatpush1.bf16.msra.mxu0 0
      %431 = vmatprep.subr.bf16.mxu0 0
      %432 = vmatpush1.bf16.msra.mxu0 0
      %433 = vmatprep.subr.bf16.mxu0 0
      %434 = vmatpush1.bf16.msra.mxu0 0
      %435 = vmatprep.subr.bf16.mxu0 0
      %436 = vmatpush1.bf16.msra.mxu0 0
      %437 = vmatprep.subr.bf16.mxu0 0
      %438 = vmatpush1.bf16.msra.mxu0 0
      %439 = vmatprep.subr.bf16.mxu0 0
      %440 = vmatpush1.bf16.msra.mxu0 0
      %441 = vmatprep.subr.bf16.mxu0 0
      %442 = vmatpush1.bf16.msra.mxu0 0
      %443 = vmatprep.subr.bf16.mxu0 0
      %444 = vmatpush1.bf16.msra.mxu0 0
      %445 = vmatprep.mubr.bf16.mxu0 0
      %446 = vmatmul.mubr.bf16.gmra.mrb[0].mxu0 %v411
      %v447 = vpop.f32.mrb[0].mxu0
      %v448 = vadd.f32 0.0, %v447
      %v449 = vpop.f32.mrb[0].mxu0
      %v450 = vpop.f32.mrb[0].mxu0
      %v451 = vadd.f32 0.0, %v450
      %v452 = vpop.f32.mrb[0].mxu0
      %453 = vdwg.mxu0
      %v454 = vadd.f32 %v361, %v448
      %v455 = vadd.f32 %v362, %v451
      %456 = vst [vmem:[#allocation2] sm:$0xff] %v454
      %457 = vst [vmem:[#allocation2 + $0x8] sm:$0x7f] %v455
      %v458 = vld [vmem:[#allocation2] sm:$0xff]
      %v459 = vld [vmem:[#allocation2 + $0x8] sm:$0xff]
      %460 = vst [vmem:[%s170] sm:$0xff] %v458
      %461 = vst [vmem:[%s170 + $0x8] sm:$0xff] %v459
      %p462 = scmp.lt.s32.totalorder %s14, 1
      %s463 = scalar_select %p462, %s14, 1
      %s464 = smul.addr %s463, 2
      %s465 = smul.addr %s464, 8
      %s466 = scalar_lea.vmem %s3, %s465
      // Predicated region
      $region33: #{projection_forward.1} parent=31 // pred_check
        %p467 = pneg %p100
      $region34: #{projection_forward.1} parent=31 // pred_check_branch
        %469 = sbr.rel (%p467) target = $region36
      $region35: #{projection_forward.1} parent=31 // pred_region
        _
      $region36: #{projection_forward.1} parent=31 // pred_fallthru
        _
    $region32: #{projection_forward.1} parent=5 // pred_fallthru
      _
    %p470 = scmp.le.s32.totalorder 2, %s9
    // Predicated region
    $region37: #{projection_forward.1} parent=5 // pred_check
      %p471 = pneg %p470
    $region38: #{projection_forward.1} parent=5 // pred_check_branch
      %473 = sbr.rel (%p471) target = $region40
    $region39: #{projection_forward.1} parent=5 // pred_region
      %s474 = ssub.s32 %s9, 2
      // Predicated region
      $region41: #{projection_forward.1} parent=39 // pred_check
        %p475 = pneg %p106
      $region42: #{projection_forward.1} parent=39 // pred_check_branch
        %477 = sbr.rel (%p475) target = $region44
      $region43: #{projection_forward.1} parent=39 // pred_region
        %p478 = scmp.lt.s32.totalorder %s15, 1
        %s479 = scalar_select %p478, %s15, 1
        %s480 = smul.addr %s479, 2
        %s481 = smul.addr %s480, 8
        %s482 = scalar_lea.vmem %s3, %s481
      $region44: #{projection_forward.1} parent=39 // pred_fallthru
        _
    $region40: #{projection_forward.1} parent=5 // pred_fallthru
      _
  $region6: #{projection_forward.1} parent=0 // loop_footer
    %s13 = sadd.s32 1, %s9
  $region7: #{projection_forward.1} parent=0 // loop_footer_branch
    %8 = sbr.rel target = $region3
  $region8: #{projection_forward.1} parent=0 // loop_exit
    _

</llo_original>
